<compile_context>
chip_gen: v5e
topology: v5e:2x2
jax: 0.10.0
libtpu: 0.0.40
codegen_flags: <defaults>
</compile_context>

<pallas_src>
import numpy as np
import jax
import jax.numpy as jnp
from jax.experimental import pallas as pl
from jax.experimental.pallas import tpu as pltpu


def _conv3x3_band_matrices(w, W):
    """(3,3,Cin,Cout) HWIO weights -> (3, W*Cin, W*Cout) banded matrices.

    B[dy][wi*Cin+ci, wo*Cout+co] = w[dy, wi-wo+1, ci, co]  for |wi - wo| <= 1,
    so   conv_out[h, wo, co] = sum_dy ( x[h+dy-1] . B[dy] )[wo*Cout + co]
    with horizontal SAME-padding implied by the band structure.
    """
    w = np.asarray(w, np.float32)
    kh, kw, Cin, Cout = w.shape
    B = np.zeros((kh, W * Cin, W * Cout), np.float32)
    for dy in range(kh):
        for dx in range(kw):
            for wo in range(W):
                wi = wo + dx - 1
                if 0 <= wi < W:
                    B[dy, wi * Cin:(wi + 1) * Cin,
                      wo * Cout:(wo + 1) * Cout] = w[dy, dx]
    return B


def basic_block_kernel(x_ref, band1_ref, band2_ref, s1_ref, t1_ref, s2_ref,
                       t2_ref, out_ref):
    # x_ref     : (1, H, W*Cin)     lane-dense input slab (one image)
    # band*_ref : (3, W*Cin, W*Cout) banded conv weights (one per vertical tap)
    # s*/t*     : (1, W*Cout)        folded BN scale / bias, pre-tiled per lane
    # out_ref   : (1, H, W*Cout)
    x = x_ref[0]                                     # (H, W*Cin), f32

    def vshift(a, s):
        # result[h] = a[h + s]; rows outside the image are zero (vertical pad).
        zero = jnp.zeros((1, a.shape[1]), a.dtype)
        if s == 1:
            return jnp.concatenate([a[1:], zero], axis=0)
        return jnp.concatenate([zero, a[:-1]], axis=0)

    def conv3x3(a, band_ref):
        cd = band_ref.dtype                          # bf16 on v6e/v7x if requested
        # Accumulator is initialized from the first tap (no zeros + add).
        acc = jnp.dot(a.astype(cd), band_ref[1],
                      preferred_element_type=jnp.float32)
        acc = acc + jnp.dot(vshift(a, -1).astype(cd), band_ref[0],
                            preferred_element_type=jnp.float32)
        acc = acc + jnp.dot(vshift(a, +1).astype(cd), band_ref[2],
                            preferred_element_type=jnp.float32)
        return acc                                   # (H, W*Cout), f32

    # conv1 -> bn1 -> relu
    y = jnp.maximum(conv3x3(x, band1_ref) * s1_ref[...] + t1_ref[...], 0.0)
    # conv2 -> bn2 -> +residual -> relu
    z = conv3x3(y, band2_ref) * s2_ref[...] + t2_ref[...] + x
    out_ref[0] = jnp.maximum(z, 0.0)


def basic_block(x_nhwc, w1, w2, bn1_scale, bn1_bias, bn2_scale, bn2_bias,
                *, mxu_dtype=jnp.float32):
    N, H, W, Cin = x_nhwc.shape
    Cout = w1.shape[-1]
    assert w1.shape == (3, 3, Cin, Cout) and w2.shape == (3, 3, Cout, Cout)
    assert Cin == Cout, "downsample=None requires inplanes == planes"
    WCi, WCo = W * Cin, W * Cout
    # TODO(synk): for W*C not 128-aligned, pad the fused lane dim to a multiple
    # of 128 (zero band rows/cols) and tile H for very large images / v7x VMEM.
    assert WCi % 128 == 0 and WCo % 128 == 0, "W*C must be a multiple of 128"

    x2d = x_nhwc.reshape(N, H, WCi)                  # metadata-only reshape
    band1 = jnp.asarray(_conv3x3_band_matrices(w1, W)).astype(mxu_dtype)
    band2 = jnp.asarray(_conv3x3_band_matrices(w2, W)).astype(mxu_dtype)
    s1 = jnp.tile(jnp.asarray(bn1_scale, jnp.float32), W).reshape(1, WCo)
    t1 = jnp.tile(jnp.asarray(bn1_bias, jnp.float32), W).reshape(1, WCo)
    s2 = jnp.tile(jnp.asarray(bn2_scale, jnp.float32), W).reshape(1, WCo)
    t2 = jnp.tile(jnp.asarray(bn2_bias, jnp.float32), W).reshape(1, WCo)

    out2d = pl.pallas_call(
        basic_block_kernel,
        out_shape=jax.ShapeDtypeStruct((N, H, WCo), jnp.float32),
        grid_spec=pltpu.PrefetchScalarGridSpec(
            num_scalar_prefetch=0,
            grid=(N,),
            in_specs=[
                pl.BlockSpec((1, H, WCi), lambda n: (n, 0, 0)),   # x (per image)
                pl.BlockSpec((3, WCi, WCo), lambda n: (0, 0, 0)), # band1
                pl.BlockSpec((3, WCo, WCo), lambda n: (0, 0, 0)), # band2
                pl.BlockSpec((1, WCo), lambda n: (0, 0)),         # bn1 scale
                pl.BlockSpec((1, WCo), lambda n: (0, 0)),         # bn1 bias
                pl.BlockSpec((1, WCo), lambda n: (0, 0)),         # bn2 scale
                pl.BlockSpec((1, WCo), lambda n: (0, 0)),         # bn2 bias
            ],
            out_specs=pl.BlockSpec((1, H, WCo), lambda n: (n, 0, 0)),
        ),
        compiler_params=pltpu.CompilerParams(
            dimension_semantics=("parallel",)),
    )(x2d, band1, band2, s1, t1, s2, t2)
    return out2d.reshape(N, H, W, Cout)


def ref_forward(x, w1, w2, s1, t1, s2, t2):
    """Pure-JAX reference (lax conv, NHWC/HWIO) for verification."""
    def conv(a, w):
        return jax.lax.conv_general_dilated(
            a, w, window_strides=(1, 1), padding="SAME",
            dimension_numbers=("NHWC", "HWIO", "NHWC"))
    y = jnp.maximum(conv(x, w1) * s1 + t1, 0.0)
    z = conv(y, w2) * s2 + t2 + x
    return jnp.maximum(z, 0.0)


if __name__ == "__main__":
    # BasicBlock(inplanes=planes=8), stride=1; W*C = 128 -> one dense lane tile
    N, H, W, C = 2, 16, 16, 8
    key = jax.random.PRNGKey(0)
    kx, k1, k2, kg1, kb1, km1, kv1, kg2, kb2, km2, kv2 = jax.random.split(key, 11)

    x = jax.random.normal(kx, (N, H, W, C), jnp.float32)

    fan_in = 3 * 3 * C
    w1 = jax.random.normal(k1, (3, 3, C, C), jnp.float32) * np.sqrt(2.0 / fan_in)
    w2 = jax.random.normal(k2, (3, 3, C, C), jnp.float32) * np.sqrt(2.0 / fan_in)

    eps = 1e-5
    g1 = 1.0 + 0.1 * jax.random.normal(kg1, (C,), jnp.float32)
    be1 = 0.1 * jax.random.normal(kb1, (C,), jnp.float32)
    m1 = 0.1 * jax.random.normal(km1, (C,), jnp.float32)
    v1 = 1.0 + 0.1 * jax.random.uniform(kv1, (C,), jnp.float32)
    g2 = 1.0 + 0.1 * jax.random.normal(kg2, (C,), jnp.float32)
    be2 = 0.1 * jax.random.normal(kb2, (C,), jnp.float32)
    m2 = 0.1 * jax.random.normal(km2, (C,), jnp.float32)
    v2 = 1.0 + 0.1 * jax.random.uniform(kv2, (C,), jnp.float32)

    # fold BN (inference mode) into per-channel scale/bias
    s1 = g1 / jnp.sqrt(v1 + eps)
    t1 = be1 - m1 * s1
    s2 = g2 / jnp.sqrt(v2 + eps)
    t2 = be2 - m2 * s2

    # f32 MXU path keeps exact parity with the f32 reference; pass
    # mxu_dtype=jnp.bfloat16 on v6e/v7x for peak MXU (tolerance ~1e-2).
    out = basic_block(x, w1, w2, s1, t1, s2, t2)
    out = jax.block_until_ready(out)

    ref = jax.block_until_ready(ref_forward(x, w1, w2, s1, t1, s2, t2))
    np.testing.assert_allclose(np.asarray(out), np.asarray(ref),
                               rtol=1e-4, atol=1e-4)
    print("KERNEL_OK")
</pallas_src>

<mosaic_0001>
module attributes {stable_mosaic.version = 11 : i64} {
  func.func @basic_block_kernel(%arg0: i32, %arg1: memref<1x16x128xf32, #tpu.memory_space<vmem>>, %arg2: memref<3x128x128xf32, #tpu.memory_space<vmem>>, %arg3: memref<3x128x128xf32, #tpu.memory_space<vmem>>, %arg4: memref<1x128xf32, #tpu.memory_space<vmem>>, %arg5: memref<1x128xf32, #tpu.memory_space<vmem>>, %arg6: memref<1x128xf32, #tpu.memory_space<vmem>>, %arg7: memref<1x128xf32, #tpu.memory_space<vmem>>, %arg8: memref<1x16x128xf32, #tpu.memory_space<vmem>>) attributes {dimension_semantics = [#tpu.dimension_semantics<parallel>], iteration_bounds = array<i64: 2>, scalar_prefetch = 0 : i64, scratch_operands = 0 : i64, tpu.core_type = #tpu.core_type<tc>, window_params = [{transform_indices = @transform_0, window_bounds = array<i64: 1, 16, 128>}, {pipeline_mode = #tpu.pipeline_mode<synchronous>, transform_indices = @transform_1, window_bounds = array<i64: 3, 128, 128>}, {pipeline_mode = #tpu.pipeline_mode<synchronous>, transform_indices = @transform_2, window_bounds = array<i64: 3, 128, 128>}, {pipeline_mode = #tpu.pipeline_mode<synchronous>, transform_indices = @transform_3, window_bounds = array<i64: 1, 128>}, {pipeline_mode = #tpu.pipeline_mode<synchronous>, transform_indices = @transform_4, window_bounds = array<i64: 1, 128>}, {pipeline_mode = #tpu.pipeline_mode<synchronous>, transform_indices = @transform_5, window_bounds = array<i64: 1, 128>}, {pipeline_mode = #tpu.pipeline_mode<synchronous>, transform_indices = @transform_6, window_bounds = array<i64: 1, 128>}, {transform_indices = @transform_7, window_bounds = array<i64: 1, 16, 128>}]} {
    %c0 = arith.constant 0 : index
    %c0_0 = arith.constant 0 : index
    %c0_1 = arith.constant 0 : index
    %0 = vector.load %arg1[%c0, %c0_0, %c0_1] : memref<1x16x128xf32, #tpu.memory_space<vmem>>, vector<1x16x128xf32>
    %1 = vector.shape_cast %0 : vector<1x16x128xf32> to vector<16x128xf32>
    %c1 = arith.constant 1 : index
    %c0_2 = arith.constant 0 : index
    %c0_3 = arith.constant 0 : index
    %2 = vector.load %arg2[%c1, %c0_2, %c0_3] : memref<3x128x128xf32, #tpu.memory_space<vmem>>, vector<1x128x128xf32>
    %3 = vector.shape_cast %2 : vector<1x128x128xf32> to vector<128x128xf32>
    %cst = arith.constant dense<0.000000e+00> : vector<16x128xf32>
    %4 = tpu.matmul %1, %3, %cst {dimension_numbers = #tpu.dot_dimension_numbers<[1], [0], [0], [1], [0, 0, 1, 1], [], []>} : vector<16x128xf32>, vector<128x128xf32>, vector<16x128xf32> -> vector<16x128xf32>
    %cst_4 = arith.constant 0.000000e+00 : f32
    %5 = vector.broadcast %cst_4 : f32 to vector<1x128xf32>
    %6 = vector.extract_strided_slice %1 {offsets = [0, 0], sizes = [15, 128], strides = [1, 1]} : vector<16x128xf32> to vector<15x128xf32>
    %7 = tpu.concatenate %5, %6 in 0 : vector<1x128xf32>, vector<15x128xf32> -> vector<16x128xf32>
    %c0_5 = arith.constant 0 : index
    %c0_6 = arith.constant 0 : index
    %c0_7 = arith.constant 0 : index
    %8 = vector.load %arg2[%c0_5, %c0_6, %c0_7] : memref<3x128x128xf32, #tpu.memory_space<vmem>>, vector<1x128x128xf32>
    %9 = vector.shape_cast %8 : vector<1x128x128xf32> to vector<128x128xf32>
    %cst_8 = arith.constant dense<0.000000e+00> : vector<16x128xf32>
    %10 = tpu.matmul %7, %9, %cst_8 {dimension_numbers = #tpu.dot_dimension_numbers<[1], [0], [0], [1], [0, 0, 1, 1], [], []>} : vector<16x128xf32>, vector<128x128xf32>, vector<16x128xf32> -> vector<16x128xf32>
    %11 = arith.addf %4, %10 : vector<16x128xf32>
    %cst_9 = arith.constant 0.000000e+00 : f32
    %12 = vector.broadcast %cst_9 : f32 to vector<1x128xf32>
    %13 = vector.extract_strided_slice %1 {offsets = [1, 0], sizes = [15, 128], strides = [1, 1]} : vector<16x128xf32> to vector<15x128xf32>
    %14 = tpu.concatenate %13, %12 in 0 : vector<15x128xf32>, vector<1x128xf32> -> vector<16x128xf32>
    %c2 = arith.constant 2 : index
    %c0_10 = arith.constant 0 : index
    %c0_11 = arith.constant 0 : index
    %15 = vector.load %arg2[%c2, %c0_10, %c0_11] : memref<3x128x128xf32, #tpu.memory_space<vmem>>, vector<1x128x128xf32>
    %16 = vector.shape_cast %15 : vector<1x128x128xf32> to vector<128x128xf32>
    %cst_12 = arith.constant dense<0.000000e+00> : vector<16x128xf32>
    %17 = tpu.matmul %14, %16, %cst_12 {dimension_numbers = #tpu.dot_dimension_numbers<[1], [0], [0], [1], [0, 0, 1, 1], [], []>} : vector<16x128xf32>, vector<128x128xf32>, vector<16x128xf32> -> vector<16x128xf32>
    %18 = arith.addf %11, %17 : vector<16x128xf32>
    %c0_13 = arith.constant 0 : index
    %c0_14 = arith.constant 0 : index
    %19 = vector.load %arg4[%c0_13, %c0_14] : memref<1x128xf32, #tpu.memory_space<vmem>>, vector<1x128xf32>
    %20 = vector.broadcast %19 : vector<1x128xf32> to vector<16x128xf32>
    %21 = arith.mulf %18, %20 : vector<16x128xf32>
    %c0_15 = arith.constant 0 : index
    %c0_16 = arith.constant 0 : index
    %22 = vector.load %arg5[%c0_15, %c0_16] : memref<1x128xf32, #tpu.memory_space<vmem>>, vector<1x128xf32>
    %23 = vector.broadcast %22 : vector<1x128xf32> to vector<16x128xf32>
    %24 = arith.addf %21, %23 : vector<16x128xf32>
    %cst_17 = arith.constant 0.000000e+00 : f32
    %25 = vector.broadcast %cst_17 : f32 to vector<16x128xf32>
    %26 = arith.maximumf %24, %25 : vector<16x128xf32>
    %c1_18 = arith.constant 1 : index
    %c0_19 = arith.constant 0 : index
    %c0_20 = arith.constant 0 : index
    %27 = vector.load %arg3[%c1_18, %c0_19, %c0_20] : memref<3x128x128xf32, #tpu.memory_space<vmem>>, vector<1x128x128xf32>
    %28 = vector.shape_cast %27 : vector<1x128x128xf32> to vector<128x128xf32>
    %cst_21 = arith.constant dense<0.000000e+00> : vector<16x128xf32>
    %29 = tpu.matmul %26, %28, %cst_21 {dimension_numbers = #tpu.dot_dimension_numbers<[1], [0], [0], [1], [0, 0, 1, 1], [], []>} : vector<16x128xf32>, vector<128x128xf32>, vector<16x128xf32> -> vector<16x128xf32>
    %cst_22 = arith.constant 0.000000e+00 : f32
    %30 = vector.broadcast %cst_22 : f32 to vector<1x128xf32>
    %31 = vector.extract_strided_slice %26 {offsets = [0, 0], sizes = [15, 128], strides = [1, 1]} : vector<16x128xf32> to vector<15x128xf32>
    %32 = tpu.concatenate %30, %31 in 0 : vector<1x128xf32>, vector<15x128xf32> -> vector<16x128xf32>
    %c0_23 = arith.constant 0 : index
    %c0_24 = arith.constant 0 : index
    %c0_25 = arith.constant 0 : index
    %33 = vector.load %arg3[%c0_23, %c0_24, %c0_25] : memref<3x128x128xf32, #tpu.memory_space<vmem>>, vector<1x128x128xf32>
    %34 = vector.shape_cast %33 : vector<1x128x128xf32> to vector<128x128xf32>
    %cst_26 = arith.constant dense<0.000000e+00> : vector<16x128xf32>
    %35 = tpu.matmul %32, %34, %cst_26 {dimension_numbers = #tpu.dot_dimension_numbers<[1], [0], [0], [1], [0, 0, 1, 1], [], []>} : vector<16x128xf32>, vector<128x128xf32>, vector<16x128xf32> -> vector<16x128xf32>
    %36 = arith.addf %29, %35 : vector<16x128xf32>
    %cst_27 = arith.constant 0.000000e+00 : f32
    %37 = vector.broadcast %cst_27 : f32 to vector<1x128xf32>
    %38 = vector.extract_strided_slice %26 {offsets = [1, 0], sizes = [15, 128], strides = [1, 1]} : vector<16x128xf32> to vector<15x128xf32>
    %39 = tpu.concatenate %38, %37 in 0 : vector<15x128xf32>, vector<1x128xf32> -> vector<16x128xf32>
    %c2_28 = arith.constant 2 : index
    %c0_29 = arith.constant 0 : index
    %c0_30 = arith.constant 0 : index
    %40 = vector.load %arg3[%c2_28, %c0_29, %c0_30] : memref<3x128x128xf32, #tpu.memory_space<vmem>>, vector<1x128x128xf32>
    %41 = vector.shape_cast %40 : vector<1x128x128xf32> to vector<128x128xf32>
    %cst_31 = arith.constant dense<0.000000e+00> : vector<16x128xf32>
    %42 = tpu.matmul %39, %41, %cst_31 {dimension_numbers = #tpu.dot_dimension_numbers<[1], [0], [0], [1], [0, 0, 1, 1], [], []>} : vector<16x128xf32>, vector<128x128xf32>, vector<16x128xf32> -> vector<16x128xf32>
    %43 = arith.addf %36, %42 : vector<16x128xf32>
    %c0_32 = arith.constant 0 : index
    %c0_33 = arith.constant 0 : index
    %44 = vector.load %arg6[%c0_32, %c0_33] : memref<1x128xf32, #tpu.memory_space<vmem>>, vector<1x128xf32>
    %45 = vector.broadcast %44 : vector<1x128xf32> to vector<16x128xf32>
    %46 = arith.mulf %43, %45 : vector<16x128xf32>
    %c0_34 = arith.constant 0 : index
    %c0_35 = arith.constant 0 : index
    %47 = vector.load %arg7[%c0_34, %c0_35] : memref<1x128xf32, #tpu.memory_space<vmem>>, vector<1x128xf32>
    %48 = vector.broadcast %47 : vector<1x128xf32> to vector<16x128xf32>
    %49 = arith.addf %46, %48 : vector<16x128xf32>
    %50 = arith.addf %49, %1 : vector<16x128xf32>
    %cst_36 = arith.constant 0.000000e+00 : f32
    %51 = vector.broadcast %cst_36 : f32 to vector<16x128xf32>
    %52 = arith.maximumf %50, %51 : vector<16x128xf32>
    %c0_37 = arith.constant 0 : index
    %c0_38 = arith.constant 0 : index
    %c0_39 = arith.constant 0 : index
    %53 = vector.load %arg8[%c0_37, %c0_38, %c0_39] : memref<1x16x128xf32, #tpu.memory_space<vmem>>, vector<1x16x128xf32>
    %54 = vector.shape_cast %53 : vector<1x16x128xf32> to vector<16x128xf32>
    %55 = vector.shape_cast %52 : vector<16x128xf32> to vector<1x16x128xf32>
    tpu.vector_store %arg8[%c0_37, %c0_38, %c0_39], %55 {strides = array<i32>} : memref<1x16x128xf32, #tpu.memory_space<vmem>>, vector<1x16x128xf32>,
    return
  }
  func.func @transform_0(%arg0: i32) -> (i32, i32, i32) {
    %c0_i32 = arith.constant 0 : i32
    %c0_i32_0 = arith.constant 0 : i32
    %c0_i32_1 = arith.constant 0 : i32
    return %arg0, %c0_i32, %c0_i32_0 : i32, i32, i32
  }
  func.func @transform_1(%arg0: i32) -> (i32, i32, i32) {
    %c0_i32 = arith.constant 0 : i32
    %c0_i32_0 = arith.constant 0 : i32
    %c0_i32_1 = arith.constant 0 : i32
    %c0_i32_2 = arith.constant 0 : i32
    return %c0_i32, %c0_i32_0, %c0_i32_1 : i32, i32, i32
  }
  func.func @transform_2(%arg0: i32) -> (i32, i32, i32) {
    %c0_i32 = arith.constant 0 : i32
    %c0_i32_0 = arith.constant 0 : i32
    %c0_i32_1 = arith.constant 0 : i32
    %c0_i32_2 = arith.constant 0 : i32
    return %c0_i32, %c0_i32_0, %c0_i32_1 : i32, i32, i32
  }
  func.func @transform_3(%arg0: i32) -> (i32, i32) {
    %c0_i32 = arith.constant 0 : i32
    %c0_i32_0 = arith.constant 0 : i32
    %c0_i32_1 = arith.constant 0 : i32
    return %c0_i32, %c0_i32_0 : i32, i32
  }
  func.func @transform_4(%arg0: i32) -> (i32, i32) {
    %c0_i32 = arith.constant 0 : i32
    %c0_i32_0 = arith.constant 0 : i32
    %c0_i32_1 = arith.constant 0 : i32
    return %c0_i32, %c0_i32_0 : i32, i32
  }
  func.func @transform_5(%arg0: i32) -> (i32, i32) {
    %c0_i32 = arith.constant 0 : i32
    %c0_i32_0 = arith.constant 0 : i32
    %c0_i32_1 = arith.constant 0 : i32
    return %c0_i32, %c0_i32_0 : i32, i32
  }
  func.func @transform_6(%arg0: i32) -> (i32, i32) {
    %c0_i32 = arith.constant 0 : i32
    %c0_i32_0 = arith.constant 0 : i32
    %c0_i32_1 = arith.constant 0 : i32
    return %c0_i32, %c0_i32_0 : i32, i32
  }
  func.func @transform_7(%arg0: i32) -> (i32, i32, i32) {
    %c0_i32 = arith.constant 0 : i32
    %c0_i32_0 = arith.constant 0 : i32
    %c0_i32_1 = arith.constant 0 : i32
    return %arg0, %c0_i32, %c0_i32_0 : i32, i32, i32
  }
}

</mosaic_0001>

<llo_original>
// kernel: tpu_custom_call.1
$region0: #{tpu_custom_call.1}
  #allocation0 [shape = 'u32[]', space=smem, size = 0x4, offset = 0x4, fixed_abs, tag = 'smem constant byte address 0x4 - core index']
  #allocation1 [shape = 'u32[72,128]{1,0:T(1,128)}', space=vmem, size = 0x9000, scoped, tag = 'internal scratch']
  %s0 = inlined_call_operand.hbm [shape: f32[2,16,128], index: 0, kind: input, shape index: {}]
  %s1 = inlined_call_operand.hbm [shape: f32[3,128,128], index: 1, kind: input, shape index: {}]
  %s2 = inlined_call_operand.hbm [shape: f32[3,128,128], index: 2, kind: input, shape index: {}]
  %s3 = inlined_call_operand.vmem [shape: f32[1,128], index: 3, kind: input, shape index: {}]
  %s4 = inlined_call_operand.vmem [shape: f32[1,128], index: 4, kind: input, shape index: {}]
  %s5 = inlined_call_operand.vmem [shape: f32[1,128], index: 5, kind: input, shape index: {}]
  %s6 = inlined_call_operand.vmem [shape: f32[1,128], index: 6, kind: input, shape index: {}]
  %s7 = inlined_call_operand.hbm [shape: f32[2,16,128], index: 7, kind: output, shape index: {}]
  %s8 = sld [smem:[#allocation0]]
  $region73: #{tpu_custom_call.1} parent=0
    _
  %s10 = ssub.s32 1, %s8
  %s11 = scalar_select 0, %s10, %s8
  $region1: #{tpu_custom_call.1} parent=0
    #allocation2 [shape = 'u8[16384]{0}', space=vmem, size = 0x4000, scoped, tag = 'input window, operand 0']
    #allocation3 [shape = 's32[2]{0}', space=sflag, size = 0x8, scoped, tag = 'scoped memory for tpu_custom_call.1']
    #allocation4 [shape = 's32[2]{0}', space=sflag, size = 0x8, scoped, tag = 'scoped memory for tpu_custom_call.1']
    #allocation5 [shape = 'u8[196608]{0}', space=vmem, size = 0x30000, scoped, tag = 'input window, operand 1, single buffered']
    #allocation6 [shape = 's32[1]{0}', space=sflag, size = 0x4, scoped, tag = 'scoped memory for tpu_custom_call.1']
    #allocation7 [shape = 'u8[196608]{0}', space=vmem, size = 0x30000, scoped, tag = 'input window, operand 2, single buffered']
    #allocation8 [shape = 'u8[16384]{0}', space=vmem, size = 0x4000, scoped, tag = 'output window, operand 0']
    %12 = vsyncpa [#allocation3], 0
    %s13 = scalar_lea.sflag [#allocation3], 1
    %14 = vsyncpa %s13, 0
    %15 = vsyncpa [#allocation6], 0
    %16 = vsyncpa [#allocation4], 0
    %s17 = scalar_lea.sflag [#allocation4], 1
    %18 = vsyncpa %s17, 0
    loop: start=0, step=1, limit=4
    $region2: #{tpu_custom_call.1} parent=1 // loop_pre_header
      _
    $region3: #{tpu_custom_call.1} parent=1 // loop_header
      %s20 = sphi 0, %s24
      %p21 = scmp.ge.s32.totalorder %s20, 4
      %s30 = sphi 0, %s32
      %s33 = sphi 0, %s30
      %s34 = sphi 0, %s33
      %s50 = sphi 0, %s34
      %s54 = sphi 0, %s54
      %s56 = sphi 0, %s54
      %s57 = sphi 0, %s56
      %s71 = sphi 0, %s57
      %s75 = sphi 0, %s75
      %s77 = sphi 0, %s75
      %s78 = sphi 0, %s77
      %s92 = sphi 0, %s78
      %s96 = sphi 0, %s96
      %s98 = sphi 0, %s96
      %s99 = sphi 0, %s98
      %s113 = sphi 0, %s99
      %s117 = sphi 0, %s117
      %s119 = sphi 0, %s117
      %s120 = sphi 0, %s119
      %s134 = sphi 0, %s120
      %s138 = sphi 0, %s138
      %s140 = sphi 0, %s138
      %s141 = sphi 0, %s140
      %s155 = sphi 0, %s141
      %s159 = sphi 0, %s159
      %s161 = sphi 0, %s159
      %s162 = sphi 0, %s161
      %s176 = sphi 0, %s162
      %s182 = sphi 0, %s184
      %s185 = sphi 0, %s182
      %s186 = sphi 0, %s185
      %s202 = sphi 0, %s186
    $region4: #{tpu_custom_call.1} parent=1 // loop_header_branch
      %23 = sbr.rel (%p21) target = $region8
    $region5: #{tpu_custom_call.1} parent=1 // loop_body
      %s25 = ssub.s32 %s20, 1
      %s26 = ssub.s32 %s20, 2
      %s27 = sadd.s32 %s20, 1
      %s28 = ssub.s32 %s20, %s27
      %p29 = scmp.eq.s32.totalorder %s28, 0
      %s31 = sadd.s32 %s30, 1
      %s32 = scalar_select %p29, %s30, %s31
      %p35 = pneg %p29
      %p36 = scmp.eq.s32.totalorder %s20, 1
      %p37 = por %p35, %p36
      %p38 = scmp.ne.s32.totalorder %s30, %s33
      %p39 = scmp.eq.s32.totalorder %s20, 0
      %p40 = por %p38, %p39
      %p41 = scmp.ne.s32.totalorder %s30, %s33
      %p42 = scmp.eq.s32.totalorder %s25, 1
      %p43 = por %p41, %p42
      %p44 = scmp.ne.s32.totalorder %s33, %s34
      %p45 = scmp.eq.s32.totalorder %s25, 0
      %p46 = por %p44, %p45
      %p47 = scmp.ne.s32.totalorder %s33, %s34
      %p48 = scmp.eq.s32.totalorder %s26, 1
      %p49 = por %p47, %p48
      %p51 = scmp.ne.s32.totalorder %s34, %s50
      %p52 = scmp.eq.s32.totalorder %s26, 0
      %p53 = por %p51, %p52
      %s55 = sadd.s32 %s54, 1
      %p58 = scmp.eq.s32.totalorder %s20, 1
      %p59 = scmp.ne.s32.totalorder %s54, %s56
      %p60 = scmp.eq.s32.totalorder %s20, 0
      %p61 = por %p59, %p60
      %p62 = scmp.ne.s32.totalorder %s54, %s56
      %p63 = scmp.eq.s32.totalorder %s25, 1
      %p64 = por %p62, %p63
      %p65 = scmp.ne.s32.totalorder %s56, %s57
      %p66 = scmp.eq.s32.totalorder %s25, 0
      %p67 = por %p65, %p66
      %p68 = scmp.ne.s32.totalorder %s56, %s57
      %p69 = scmp.eq.s32.totalorder %s26, 1
      %p70 = por %p68, %p69
      %p72 = scmp.ne.s32.totalorder %s57, %s71
      %p73 = scmp.eq.s32.totalorder %s26, 0
      %p74 = por %p72, %p73
      %s76 = sadd.s32 %s75, 1
      %p79 = scmp.eq.s32.totalorder %s20, 1
      %p80 = scmp.ne.s32.totalorder %s75, %s77
      %p81 = scmp.eq.s32.totalorder %s20, 0
      %p82 = por %p80, %p81
      %p83 = scmp.ne.s32.totalorder %s75, %s77
      %p84 = scmp.eq.s32.totalorder %s25, 1
      %p85 = por %p83, %p84
      %p86 = scmp.ne.s32.totalorder %s77, %s78
      %p87 = scmp.eq.s32.totalorder %s25, 0
      %p88 = por %p86, %p87
      %p89 = scmp.ne.s32.totalorder %s77, %s78
      %p90 = scmp.eq.s32.totalorder %s26, 1
      %p91 = por %p89, %p90
      %p93 = scmp.ne.s32.totalorder %s78, %s92
      %p94 = scmp.eq.s32.totalorder %s26, 0
      %p95 = por %p93, %p94
      %s97 = sadd.s32 %s96, 1
      %p100 = scmp.eq.s32.totalorder %s20, 1
      %p101 = scmp.ne.s32.totalorder %s96, %s98
      %p102 = scmp.eq.s32.totalorder %s20, 0
      %p103 = por %p101, %p102
      %p104 = scmp.ne.s32.totalorder %s96, %s98
      %p105 = scmp.eq.s32.totalorder %s25, 1
      %p106 = por %p104, %p105
      %p107 = scmp.ne.s32.totalorder %s98, %s99
      %p108 = scmp.eq.s32.totalorder %s25, 0
      %p109 = por %p107, %p108
      %p110 = scmp.ne.s32.totalorder %s98, %s99
      %p111 = scmp.eq.s32.totalorder %s26, 1
      %p112 = por %p110, %p111
      %p114 = scmp.ne.s32.totalorder %s99, %s113
      %p115 = scmp.eq.s32.totalorder %s26, 0
      %p116 = por %p114, %p115
      %s118 = sadd.s32 %s117, 1
      %p121 = scmp.eq.s32.totalorder %s20, 1
      %p122 = scmp.ne.s32.totalorder %s117, %s119
      %p123 = scmp.eq.s32.totalorder %s20, 0
      %p124 = por %p122, %p123
      %p125 = scmp.ne.s32.totalorder %s117, %s119
      %p126 = scmp.eq.s32.totalorder %s25, 1
      %p127 = por %p125, %p126
      %p128 = scmp.ne.s32.totalorder %s119, %s120
      %p129 = scmp.eq.s32.totalorder %s25, 0
      %p130 = por %p128, %p129
      %p131 = scmp.ne.s32.totalorder %s119, %s120
      %p132 = scmp.eq.s32.totalorder %s26, 1
      %p133 = por %p131, %p132
      %p135 = scmp.ne.s32.totalorder %s120, %s134
      %p136 = scmp.eq.s32.totalorder %s26, 0
      %p137 = por %p135, %p136
      %s139 = sadd.s32 %s138, 1
      %p142 = scmp.eq.s32.totalorder %s20, 1
      %p143 = scmp.ne.s32.totalorder %s138, %s140
      %p144 = scmp.eq.s32.totalorder %s20, 0
      %p145 = por %p143, %p144
      %p146 = scmp.ne.s32.totalorder %s138, %s140
      %p147 = scmp.eq.s32.totalorder %s25, 1
      %p148 = por %p146, %p147
      %p149 = scmp.ne.s32.totalorder %s140, %s141
      %p150 = scmp.eq.s32.totalorder %s25, 0
      %p151 = por %p149, %p150
      %p152 = scmp.ne.s32.totalorder %s140, %s141
      %p153 = scmp.eq.s32.totalorder %s26, 1
      %p154 = por %p152, %p153
      %p156 = scmp.ne.s32.totalorder %s141, %s155
      %p157 = scmp.eq.s32.totalorder %s26, 0
      %p158 = por %p156, %p157
      %s160 = sadd.s32 %s159, 1
      %p163 = scmp.eq.s32.totalorder %s20, 1
      %p164 = scmp.ne.s32.totalorder %s159, %s161
      %p165 = scmp.eq.s32.totalorder %s20, 0
      %p166 = por %p164, %p165
      %p167 = scmp.ne.s32.totalorder %s159, %s161
      %p168 = scmp.eq.s32.totalorder %s25, 1
      %p169 = por %p167, %p168
      %p170 = scmp.ne.s32.totalorder %s161, %s162
      %p171 = scmp.eq.s32.totalorder %s25, 0
      %p172 = por %p170, %p171
      %p173 = scmp.ne.s32.totalorder %s161, %s162
      %p174 = scmp.eq.s32.totalorder %s26, 1
      %p175 = por %p173, %p174
      %p177 = scmp.ne.s32.totalorder %s162, %s176
      %p178 = scmp.eq.s32.totalorder %s26, 0
      %p179 = por %p177, %p178
      %s180 = ssub.s32 %s20, %s27
      %p181 = scmp.eq.s32.totalorder %s180, 0
      %s183 = sadd.s32 %s182, 1
      %s184 = scalar_select %p181, %s182, %s183
      %p187 = pneg %p181
      %p188 = scmp.eq.s32.totalorder %s20, 1
      %p189 = por %p187, %p188
      %p190 = scmp.ne.s32.totalorder %s182, %s185
      %p191 = scmp.eq.s32.totalorder %s20, 0
      %p192 = por %p190, %p191
      %p193 = scmp.ne.s32.totalorder %s182, %s185
      %p194 = scmp.eq.s32.totalorder %s25, 1
      %p195 = por %p193, %p194
      %p196 = scmp.ne.s32.totalorder %s185, %s186
      %p197 = scmp.eq.s32.totalorder %s25, 0
      %p198 = por %p196, %p197
      %p199 = scmp.ne.s32.totalorder %s185, %s186
      %p200 = scmp.eq.s32.totalorder %s26, 1
      %p201 = por %p199, %p200
      %p203 = scmp.ne.s32.totalorder %s186, %s202
      %p204 = scmp.eq.s32.totalorder %s26, 0
      %p205 = por %p203, %p204
      %p206 = scmp.le.s32.totalorder 1, %s20
      %p207 = scmp.lt.s32.totalorder %s20, 3
      %p208 = pnand %p206, %p207
      %p209 = pneg %p208
      // Predicated region
      $region9: #{tpu_custom_call.1} parent=5 // pred_check
        _
      $region10: #{tpu_custom_call.1} parent=5 // pred_check_branch
        %211 = sbr.rel (%p208) target = $region12
      $region11: #{tpu_custom_call.1} parent=5 // pred_region
        %s212 = ssub.s32 %s20, 1
        // Predicated region
        $region13: #{tpu_custom_call.1} parent=11 // pred_check
          %p213 = pneg %p67
        $region14: #{tpu_custom_call.1} parent=11 // pred_check_branch
          %215 = sbr.rel (%p213) target = $region16
        $region15: #{tpu_custom_call.1} parent=11 // pred_region
          %217 = vsyncadd [#allocation6], 0
          %s218 = sshll.u32 %s1, 4
          %s219 = int_to_ptr.hbm [resolvable:$true] %s218
          %s220 = sshll.u32 [#allocation5], 4
          %s221 = int_to_ptr.vmem [resolvable:$true] %s220
          %226 = dma.hbm_to_vmem [thread:$0]  %s219, 6144, %s221, [#allocation6], 128, 128, 8
        $region16: #{tpu_custom_call.1} parent=11 // pred_fallthru
          _
        // Predicated region
        $region17: #{tpu_custom_call.1} parent=11 // pred_check
          %p227 = pneg %p88
        $region18: #{tpu_custom_call.1} parent=11 // pred_check_branch
          %229 = sbr.rel (%p227) target = $region20
        $region19: #{tpu_custom_call.1} parent=11 // pred_region
          %231 = vsyncadd [#allocation6], 0
          %s232 = sshll.u32 %s2, 4
          %s233 = int_to_ptr.hbm [resolvable:$true] %s232
          %s234 = sshll.u32 [#allocation7], 4
          %s235 = int_to_ptr.vmem [resolvable:$true] %s234
          %240 = dma.hbm_to_vmem [thread:$0]  %s233, 6144, %s235, [#allocation6], 128, 128, 8
        $region20: #{tpu_custom_call.1} parent=11 // pred_fallthru
          _
        // Predicated region
        $region21: #{tpu_custom_call.1} parent=11 // pred_check
          %p241 = pneg %p109
        $region22: #{tpu_custom_call.1} parent=11 // pred_check_branch
          %243 = sbr.rel (%p241) target = $region24
        $region23: #{tpu_custom_call.1} parent=11 // pred_region
          _
        $region24: #{tpu_custom_call.1} parent=11 // pred_fallthru
          _
        // Predicated region
        $region25: #{tpu_custom_call.1} parent=11 // pred_check
          %p244 = pneg %p130
        $region26: #{tpu_custom_call.1} parent=11 // pred_check_branch
          %246 = sbr.rel (%p244) target = $region28
        $region27: #{tpu_custom_call.1} parent=11 // pred_region
          _
        $region28: #{tpu_custom_call.1} parent=11 // pred_fallthru
          _
        // Predicated region
        $region29: #{tpu_custom_call.1} parent=11 // pred_check
          %p247 = pneg %p151
        $region30: #{tpu_custom_call.1} parent=11 // pred_check_branch
          %249 = sbr.rel (%p247) target = $region32
        $region31: #{tpu_custom_call.1} parent=11 // pred_region
          _
        $region32: #{tpu_custom_call.1} parent=11 // pred_fallthru
          _
        // Predicated region
        $region33: #{tpu_custom_call.1} parent=11 // pred_check
          %p250 = pneg %p172
        $region34: #{tpu_custom_call.1} parent=11 // pred_check_branch
          %252 = sbr.rel (%p250) target = $region36
        $region35: #{tpu_custom_call.1} parent=11 // pred_region
          _
        $region36: #{tpu_custom_call.1} parent=11 // pred_fallthru
          _
      $region12: #{tpu_custom_call.1} parent=5 // pred_fallthru
        _
      %p253 = scmp.lt.s32.totalorder %s20, 2
      // Predicated region
      $region37: #{tpu_custom_call.1} parent=5 // pred_check
        %p254 = pneg %p253
      $region38: #{tpu_custom_call.1} parent=5 // pred_check_branch
        %256 = sbr.rel (%p254) target = $region40
      $region39: #{tpu_custom_call.1} parent=5 // pred_region
        // Predicated region
        $region41: #{tpu_custom_call.1} parent=39 // pred_check
          %p257 = pneg %p40
        $region42: #{tpu_custom_call.1} parent=39 // pred_check_branch
          %259 = sbr.rel (%p257) target = $region44
        $region43: #{tpu_custom_call.1} parent=39 // pred_region
          %s260 = sand.u32 %s30, 1
          %s261 = scalar_lea.sflag [#allocation3], %s260
          %s262 = sand.u32 %s30, 1
          %s263 = smul.addr %s262, 16
          %s264 = scalar_lea.vmem [#allocation2], %s263
          %266 = vsyncadd %s261, 0
          %s267 = smul.addr %s20, 2
          %s268 = smul.addr %s267, 8
          %s269 = scalar_lea.hbm %s0, %s268
          %s270 = sshll.u32 %s269, 4
          %s271 = int_to_ptr.hbm [resolvable:$true] %s270
          %s272 = sshll.u32 %s264, 4
          %s273 = int_to_ptr.vmem [resolvable:$true] %s272
          %278 = dma.hbm_to_vmem [thread:$0]  %s271, 256, %s273, %s261, 128, 128, 8
        $region44: #{tpu_custom_call.1} parent=39 // pred_fallthru
          _
      $region40: #{tpu_custom_call.1} parent=5 // pred_fallthru
        _
      %p279 = scmp.le.s32.totalorder 1, %s20
      %p280 = scmp.lt.s32.totalorder %s20, 3
      %p281 = pnand %p279, %p280
      %p282 = pneg %p281
      // Predicated region
      $region45: #{tpu_custom_call.1} parent=5 // pred_check
        _
      $region46: #{tpu_custom_call.1} parent=5 // pred_check_branch
        %284 = sbr.rel (%p281) target = $region48
      $region47: #{tpu_custom_call.1} parent=5 // pred_region
        %s285 = ssub.s32 %s20, 1
        %s286 = sand.u32 %s33, 1
        %s287 = scalar_lea.sflag [#allocation3], %s286
        %s288 = sand.u32 %s33, 1
        %s289 = smul.addr %s288, 16
        %s290 = scalar_lea.vmem [#allocation2], %s289
        // Predicated region
        $region49: #{tpu_custom_call.1} parent=47 // pred_check
          %p291 = pneg %p46
        $region50: #{tpu_custom_call.1} parent=47 // pred_check_branch
          %293 = sbr.rel (%p291) target = $region52
        $region51: #{tpu_custom_call.1} parent=47 // pred_region
          %295 = dma.done %s287, 256
        $region52: #{tpu_custom_call.1} parent=47 // pred_fallthru
          _
        // Predicated region
        $region53: #{tpu_custom_call.1} parent=47 // pred_check
          %p296 = pneg %p67
        $region54: #{tpu_custom_call.1} parent=47 // pred_check_branch
          %298 = sbr.rel (%p296) target = $region56
        $region55: #{tpu_custom_call.1} parent=47 // pred_region
          %300 = dma.done [#allocation6], 6144
        $region56: #{tpu_custom_call.1} parent=47 // pred_fallthru
          _
        // Predicated region
        $region57: #{tpu_custom_call.1} parent=47 // pred_check
          %p301 = pneg %p88
        $region58: #{tpu_custom_call.1} parent=47 // pred_check_branch
          %303 = sbr.rel (%p301) target = $region60
        $region59: #{tpu_custom_call.1} parent=47 // pred_region
          %305 = dma.done [#allocation6], 6144
        $region60: #{tpu_custom_call.1} parent=47 // pred_fallthru
          _
        %s306 = sand.u32 %s33, 1
        %s307 = scalar_lea.sflag [#allocation3], %s306
        %s308 = sand.u32 %s33, 1
        %s309 = smul.addr %s308, 16
        %s310 = scalar_lea.vmem [#allocation2], %s309
        %p311 = pneg %p46
        %p312 = pneg %p43
        %p313 = pneg %p67
        %p314 = pneg %p64
        %p315 = pneg %p88
        %p316 = pneg %p85
        %p317 = pneg %p109
        %p318 = pneg %p106
        %p319 = pneg %p130
        %p320 = pneg %p127
        %p321 = pneg %p151
        %p322 = pneg %p148
        %p323 = pneg %p172
        %p324 = pneg %p169
        %p325 = pneg %p198
        %p326 = pneg %p195
        %s327 = sand.u32 %s185, 1
        %s328 = scalar_lea.sflag [#allocation4], %s327
        %s329 = sand.u32 %s185, 1
        %s330 = smul.addr %s329, 16
        %s331 = scalar_lea.vmem [#allocation8], %s330
        %v332 = vld [vmem:[%s290] sm:$0xff]
        %v333 = vld [vmem:[%s290 + $0x8] sm:$0xff]
        %s334 = scalar_lea.vmem [#allocation5], 128
        %v335 = vld [vmem:[%s334] sm:$0xff]
        %v336 = vld [vmem:[%s334 + $0x8] sm:$0xff]
        %v337 = vld [vmem:[%s334 + $0x10] sm:$0xff]
        %v338 = vld [vmem:[%s334 + $0x18] sm:$0xff]
        %v339 = vld [vmem:[%s334 + $0x20] sm:$0xff]
        %v340 = vld [vmem:[%s334 + $0x28] sm:$0xff]
        %v341 = vld [vmem:[%s334 + $0x30] sm:$0xff]
        %v342 = vld [vmem:[%s334 + $0x38] sm:$0xff]
        %v343 = vld [vmem:[%s334 + $0x40] sm:$0xff]
        %v344 = vld [vmem:[%s334 + $0x48] sm:$0xff]
        %v345 = vld [vmem:[%s334 + $0x50] sm:$0xff]
        %v346 = vld [vmem:[%s334 + $0x58] sm:$0xff]
        %v347 = vld [vmem:[%s334 + $0x60] sm:$0xff]
        %v348 = vld [vmem:[%s334 + $0x68] sm:$0xff]
        %v349 = vld [vmem:[%s334 + $0x70] sm:$0xff]
        %v350 = vld [vmem:[%s334 + $0x78] sm:$0xff]
        %vm353 = vcmask 1040384
        %v354 = vrot.slane %v332, 7
        %v355 = vrot.slane %v333, 7
        %v356 = vsel %vm353, %v354, %v355
        %v359 = vsel %vm353, 0.0, %v354
        %v360 = vld [vmem:[#allocation5] sm:$0xff]
        %v361 = vld [vmem:[#allocation5 + $0x8] sm:$0xff]
        %v362 = vld [vmem:[#allocation5 + $0x10] sm:$0xff]
        %v363 = vld [vmem:[#allocation5 + $0x18] sm:$0xff]
        %v364 = vld [vmem:[#allocation5 + $0x20] sm:$0xff]
        %v365 = vld [vmem:[#allocation5 + $0x28] sm:$0xff]
        %v366 = vld [vmem:[#allocation5 + $0x30] sm:$0xff]
        %v367 = vld [vmem:[#allocation5 + $0x38] sm:$0xff]
        %v368 = vld [vmem:[#allocation5 + $0x40] sm:$0xff]
        %v369 = vld [vmem:[#allocation5 + $0x48] sm:$0xff]
        %v370 = vld [vmem:[#allocation5 + $0x50] sm:$0xff]
        %v371 = vld [vmem:[#allocation5 + $0x58] sm:$0xff]
        %v372 = vld [vmem:[#allocation5 + $0x60] sm:$0xff]
        %v373 = vld [vmem:[#allocation5 + $0x68] sm:$0xff]
        %v374 = vld [vmem:[#allocation5 + $0x70] sm:$0xff]
        %v375 = vld [vmem:[#allocation5 + $0x78] sm:$0xff]
        %376 = vmatpush.msra.mxu0 %v375
        %377 = vmatpush.msra.mxu0 %v374
        %378 = vmatpush.msra.mxu0 %v373
        %379 = vmatpush.msra.mxu0 %v372
        %380 = vmatpush.msra.mxu0 %v371
        %381 = vmatpush.msra.mxu0 %v370
        %382 = vmatpush.msra.mxu0 %v369
        %383 = vmatpush.msra.mxu0 %v368
        %384 = vmatpush.msra.mxu0 %v367
        %385 = vmatpush.msra.mxu0 %v366
        %386 = vmatpush.msra.mxu0 %v365
        %387 = vmatpush.msra.mxu0 %v364
        %388 = vmatpush.msra.mxu0 %v363
        %389 = vmatpush.msra.mxu0 %v362
        %390 = vmatpush.msra.mxu0 %v361
        %391 = vmatpush.msra.mxu0 %v360
        %392 = vmatmul.f32.gmra.mxu0 %v359
        %v393 = vpop.f32.mrf.mxu0
        %v394 = vadd.f32 0.0, %v393
        %395 = vmatmul.f32.gmra.mxu0 %v356
        %v396 = vpop.f32.mrf.mxu0
        %v397 = vadd.f32 0.0, %v396
        %398 = vdwg.mxu0
        %399 = vmatpush.msra.mxu0 %v350
        %400 = vmatpush.msra.mxu0 %v349
        %401 = vmatpush.msra.mxu0 %v348
        %402 = vmatpush.msra.mxu0 %v347
        %403 = vmatpush.msra.mxu0 %v346
        %404 = vmatpush.msra.mxu0 %v345
        %405 = vmatpush.msra.mxu0 %v344
        %406 = vmatpush.msra.mxu0 %v343
        %407 = vmatpush.msra.mxu0 %v342
        %408 = vmatpush.msra.mxu0 %v341
        %409 = vmatpush.msra.mxu0 %v340
        %410 = vmatpush.msra.mxu0 %v339
        %411 = vmatpush.msra.mxu0 %v338
        %412 = vmatpush.msra.mxu0 %v337
        %413 = vmatpush.msra.mxu0 %v336
        %414 = vmatpush.msra.mxu0 %v335
        %415 = vmatmul.f32.gmra.mxu0 %v332
        %v416 = vpop.f32.mrf.mxu0
        %v417 = vadd.f32 %v394, %v416
        %418 = vmatmul.f32.gmra.mxu0 %v333
        %v419 = vpop.f32.mrf.mxu0
        %v420 = vadd.f32 %v397, %v419
        %421 = vdwg.mxu0
        %vm422 = vcmask 1046528
        %v423 = vrot.slane %v332, 1
        %v424 = vrot.slane %v333, 1
        %v425 = vsel %vm422, %v423, %v424
        %v428 = vsel %vm422, %v424, 0.0
        %s429 = scalar_lea.vmem [#allocation5], 256
        %v430 = vld [vmem:[%s429] sm:$0xff]
        %v431 = vld [vmem:[%s429 + $0x8] sm:$0xff]
        %v432 = vld [vmem:[%s429 + $0x10] sm:$0xff]
        %v433 = vld [vmem:[%s429 + $0x18] sm:$0xff]
        %v434 = vld [vmem:[%s429 + $0x20] sm:$0xff]
        %v435 = vld [vmem:[%s429 + $0x28] sm:$0xff]
        %v436 = vld [vmem:[%s429 + $0x30] sm:$0xff]
        %v437 = vld [vmem:[%s429 + $0x38] sm:$0xff]
        %v438 = vld [vmem:[%s429 + $0x40] sm:$0xff]
        %v439 = vld [vmem:[%s429 + $0x48] sm:$0xff]
        %v440 = vld [vmem:[%s429 + $0x50] sm:$0xff]
        %v441 = vld [vmem:[%s429 + $0x58] sm:$0xff]
        %v442 = vld [vmem:[%s429 + $0x60] sm:$0xff]
        %v443 = vld [vmem:[%s429 + $0x68] sm:$0xff]
        %v444 = vld [vmem:[%s429 + $0x70] sm:$0xff]
        %v445 = vld [vmem:[%s429 + $0x78] sm:$0xff]
        %446 = vmatpush.msra.mxu0 %v445
        %447 = vmatpush.msra.mxu0 %v444
        %448 = vmatpush.msra.mxu0 %v443
        %449 = vmatpush.msra.mxu0 %v442
        %450 = vmatpush.msra.mxu0 %v441
        %451 = vmatpush.msra.mxu0 %v440
        %452 = vmatpush.msra.mxu0 %v439
        %453 = vmatpush.msra.mxu0 %v438
        %454 = vmatpush.msra.mxu0 %v437
        %455 = vmatpush.msra.mxu0 %v436
        %456 = vmatpush.msra.mxu0 %v435
        %457 = vmatpush.msra.mxu0 %v434
        %458 = vmatpush.msra.mxu0 %v433
        %459 = vmatpush.msra.mxu0 %v432
        %460 = vmatpush.msra.mxu0 %v431
        %461 = vmatpush.msra.mxu0 %v430
        %462 = vmatmul.f32.gmra.mxu0 %v425
        %v463 = vpop.f32.mrf.mxu0
        %v464 = vadd.f32 0.0, %v463
        %465 = vmatmul.f32.gmra.mxu0 %v428
        %v466 = vpop.f32.mrf.mxu0
        %v467 = vadd.f32 0.0, %v466
        %468 = vdwg.mxu0
        %v469 = vadd.f32 %v417, %v464
        %v470 = vadd.f32 %v420, %v467
        %v471 = vld [vmem:[%s3] sm:$0x1]
        %v473 = vperm.slane %v471, 0
        %v475 = vmul.f32 %v469, %v473
        %v476 = vmul.f32 %v470, %v473
        %v477 = vld [vmem:[%s4] sm:$0x1]
        %v479 = vperm.slane %v477, 0
        %v481 = vadd.f32 %v475, %v479
        %v482 = vadd.f32 %v476, %v479
        %v483 = vmax.f32 %v481, 0.0
        %v484 = vmax.f32 %v482, 0.0
        %s485 = scalar_lea.vmem [#allocation7], 128
        %v486 = vld [vmem:[%s485] sm:$0xff]
        %v487 = vld [vmem:[%s485 + $0x8] sm:$0xff]
        %v488 = vld [vmem:[%s485 + $0x10] sm:$0xff]
        %v489 = vld [vmem:[%s485 + $0x18] sm:$0xff]
        %v490 = vld [vmem:[%s485 + $0x20] sm:$0xff]
        %v491 = vld [vmem:[%s485 + $0x28] sm:$0xff]
        %v492 = vld [vmem:[%s485 + $0x30] sm:$0xff]
        %v493 = vld [vmem:[%s485 + $0x38] sm:$0xff]
        %v494 = vld [vmem:[%s485 + $0x40] sm:$0xff]
        %v495 = vld [vmem:[%s485 + $0x48] sm:$0xff]
        %v496 = vld [vmem:[%s485 + $0x50] sm:$0xff]
        %v497 = vld [vmem:[%s485 + $0x58] sm:$0xff]
        %v498 = vld [vmem:[%s485 + $0x60] sm:$0xff]
        %v499 = vld [vmem:[%s485 + $0x68] sm:$0xff]
        %v500 = vld [vmem:[%s485 + $0x70] sm:$0xff]
        %v501 = vld [vmem:[%s485 + $0x78] sm:$0xff]
        %v504 = vrot.slane %v483, 7
        %v505 = vrot.slane %v484, 7
        %v506 = vsel %vm353, %v504, %v505
        %v509 = vsel %vm353, 0.0, %v504
        %v510 = vld [vmem:[#allocation7] sm:$0xff]
        %v511 = vld [vmem:[#allocation7 + $0x8] sm:$0xff]
        %v512 = vld [vmem:[#allocation7 + $0x10] sm:$0xff]
        %v513 = vld [vmem:[#allocation7 + $0x18] sm:$0xff]
        %v514 = vld [vmem:[#allocation7 + $0x20] sm:$0xff]
        %v515 = vld [vmem:[#allocation7 + $0x28] sm:$0xff]
        %v516 = vld [vmem:[#allocation7 + $0x30] sm:$0xff]
        %v517 = vld [vmem:[#allocation7 + $0x38] sm:$0xff]
        %v518 = vld [vmem:[#allocation7 + $0x40] sm:$0xff]
        %v519 = vld [vmem:[#allocation7 + $0x48] sm:$0xff]
        %v520 = vld [vmem:[#allocation7 + $0x50] sm:$0xff]
        %v521 = vld [vmem:[#allocation7 + $0x58] sm:$0xff]
        %v522 = vld [vmem:[#allocation7 + $0x60] sm:$0xff]
        %v523 = vld [vmem:[#allocation7 + $0x68] sm:$0xff]
        %v524 = vld [vmem:[#allocation7 + $0x70] sm:$0xff]
        %v525 = vld [vmem:[#allocation7 + $0x78] sm:$0xff]
        %526 = vmatpush.msra.mxu0 %v525
        %527 = vmatpush.msra.mxu0 %v524
        %528 = vmatpush.msra.mxu0 %v523
        %529 = vmatpush.msra.mxu0 %v522
        %530 = vmatpush.msra.mxu0 %v521
        %531 = vmatpush.msra.mxu0 %v520
        %532 = vmatpush.msra.mxu0 %v519
        %533 = vmatpush.msra.mxu0 %v518
        %534 = vmatpush.msra.mxu0 %v517
        %535 = vmatpush.msra.mxu0 %v516
        %536 = vmatpush.msra.mxu0 %v515
        %537 = vmatpush.msra.mxu0 %v514
        %538 = vmatpush.msra.mxu0 %v513
        %539 = vmatpush.msra.mxu0 %v512
        %540 = vmatpush.msra.mxu0 %v511
        %541 = vmatpush.msra.mxu0 %v510
        %542 = vmatmul.f32.gmra.mxu0 %v509
        %v543 = vpop.f32.mrf.mxu0
        %v544 = vadd.f32 0.0, %v543
        %545 = vmatmul.f32.gmra.mxu0 %v506
        %v546 = vpop.f32.mrf.mxu0
        %v547 = vadd.f32 0.0, %v546
        %548 = vdwg.mxu0
        %549 = vmatpush.msra.mxu0 %v501
        %550 = vmatpush.msra.mxu0 %v500
        %551 = vmatpush.msra.mxu0 %v499
        %552 = vmatpush.msra.mxu0 %v498
        %553 = vmatpush.msra.mxu0 %v497
        %554 = vmatpush.msra.mxu0 %v496
        %555 = vmatpush.msra.mxu0 %v495
        %556 = vmatpush.msra.mxu0 %v494
        %557 = vmatpush.msra.mxu0 %v493
        %558 = vmatpush.msra.mxu0 %v492
        %559 = vmatpush.msra.mxu0 %v491
        %560 = vmatpush.msra.mxu0 %v490
        %561 = vmatpush.msra.mxu0 %v489
        %562 = vmatpush.msra.mxu0 %v488
        %563 = vmatpush.msra.mxu0 %v487
        %564 = vmatpush.msra.mxu0 %v486
        %565 = vmatmul.f32.gmra.mxu0 %v483
        %v566 = vpop.f32.mrf.mxu0
        %v567 = vadd.f32 %v544, %v566
        %568 = vmatmul.f32.gmra.mxu0 %v484
        %v569 = vpop.f32.mrf.mxu0
        %v570 = vadd.f32 %v547, %v569
        %571 = vdwg.mxu0
        %v572 = vrot.slane %v483, 1
        %v573 = vrot.slane %v484, 1
        %v574 = vsel %vm422, %v572, %v573
        %v577 = vsel %vm422, %v573, 0.0
        %s578 = scalar_lea.vmem [#allocation7], 256
        %v579 = vld [vmem:[%s578] sm:$0xff]
        %v580 = vld [vmem:[%s578 + $0x8] sm:$0xff]
        %v581 = vld [vmem:[%s578 + $0x10] sm:$0xff]
        %v582 = vld [vmem:[%s578 + $0x18] sm:$0xff]
        %v583 = vld [vmem:[%s578 + $0x20] sm:$0xff]
        %v584 = vld [vmem:[%s578 + $0x28] sm:$0xff]
        %v585 = vld [vmem:[%s578 + $0x30] sm:$0xff]
        %v586 = vld [vmem:[%s578 + $0x38] sm:$0xff]
        %v587 = vld [vmem:[%s578 + $0x40] sm:$0xff]
        %v588 = vld [vmem:[%s578 + $0x48] sm:$0xff]
        %v589 = vld [vmem:[%s578 + $0x50] sm:$0xff]
        %v590 = vld [vmem:[%s578 + $0x58] sm:$0xff]
        %v591 = vld [vmem:[%s578 + $0x60] sm:$0xff]
        %v592 = vld [vmem:[%s578 + $0x68] sm:$0xff]
        %v593 = vld [vmem:[%s578 + $0x70] sm:$0xff]
        %v594 = vld [vmem:[%s578 + $0x78] sm:$0xff]
        %595 = vmatpush.msra.mxu0 %v594
        %596 = vmatpush.msra.mxu0 %v593
        %597 = vmatpush.msra.mxu0 %v592
        %598 = vmatpush.msra.mxu0 %v591
        %599 = vmatpush.msra.mxu0 %v590
        %600 = vmatpush.msra.mxu0 %v589
        %601 = vmatpush.msra.mxu0 %v588
        %602 = vmatpush.msra.mxu0 %v587
        %603 = vmatpush.msra.mxu0 %v586
        %604 = vmatpush.msra.mxu0 %v585
        %605 = vmatpush.msra.mxu0 %v584
        %606 = vmatpush.msra.mxu0 %v583
        %607 = vmatpush.msra.mxu0 %v582
        %608 = vmatpush.msra.mxu0 %v581
        %609 = vmatpush.msra.mxu0 %v580
        %610 = vmatpush.msra.mxu0 %v579
        %611 = vmatmul.f32.gmra.mxu0 %v574
        %v612 = vpop.f32.mrf.mxu0
        %v613 = vadd.f32 0.0, %v612
        %614 = vmatmul.f32.gmra.mxu0 %v577
        %v615 = vpop.f32.mrf.mxu0
        %v616 = vadd.f32 0.0, %v615
        %617 = vdwg.mxu0
        %v618 = vadd.f32 %v567, %v613
        %v619 = vadd.f32 %v570, %v616
        %v620 = vld [vmem:[%s5] sm:$0x1]
        %v622 = vperm.slane %v620, 0
        %v624 = vmul.f32 %v618, %v622
        %v625 = vmul.f32 %v619, %v622
        %v626 = vld [vmem:[%s6] sm:$0x1]
        %v628 = vperm.slane %v626, 0
        %v630 = vadd.f32 %v624, %v628
        %v631 = vadd.f32 %v625, %v628
        %v632 = vadd.f32 %v630, %v332
        %v633 = vadd.f32 %v631, %v333
        %v634 = vmax.f32 %v632, 0.0
        %v635 = vmax.f32 %v633, 0.0
        %636 = vst [vmem:[%s331] sm:$0xff] %v634
        %637 = vst [vmem:[%s331 + $0x8] sm:$0xff] %v635
        %s638 = sand.u32 %s185, 1
        %s639 = scalar_lea.sflag [#allocation4], %s638
        %s640 = sand.u32 %s185, 1
        %s641 = smul.addr %s640, 16
        %s642 = scalar_lea.vmem [#allocation8], %s641
        // Predicated region
        $region61: #{tpu_custom_call.1} parent=47 // pred_check
          %p643 = pneg %p195
        $region62: #{tpu_custom_call.1} parent=47 // pred_check_branch
          %645 = sbr.rel (%p643) target = $region64
        $region63: #{tpu_custom_call.1} parent=47 // pred_region
          %647 = vsyncadd %s639, 0
          %s648 = smul.addr %s25, 2
          %s649 = smul.addr %s648, 8
          %s650 = scalar_lea.hbm %s7, %s649
          %s651 = sshll.u32 %s642, 4
          %s652 = int_to_ptr.vmem [resolvable:$true] %s651
          %s653 = sshll.u32 %s650, 4
          %s654 = int_to_ptr.hbm [resolvable:$true] %s653
          %659 = dma.vmem_to_hbm [thread:$0]  %s652, 256, %s654, %s639, 128, 128, 8
        $region64: #{tpu_custom_call.1} parent=47 // pred_fallthru
          _
      $region48: #{tpu_custom_call.1} parent=5 // pred_fallthru
        _
      %p660 = scmp.le.s32.totalorder 2, %s20
      // Predicated region
      $region65: #{tpu_custom_call.1} parent=5 // pred_check
        %p661 = pneg %p660
      $region66: #{tpu_custom_call.1} parent=5 // pred_check_branch
        %663 = sbr.rel (%p661) target = $region68
      $region67: #{tpu_custom_call.1} parent=5 // pred_region
        %s664 = ssub.s32 %s20, 2
        // Predicated region
        $region69: #{tpu_custom_call.1} parent=67 // pred_check
          %p665 = pneg %p201
        $region70: #{tpu_custom_call.1} parent=67 // pred_check_branch
          %667 = sbr.rel (%p665) target = $region72
        $region71: #{tpu_custom_call.1} parent=67 // pred_region
          %s668 = sand.u32 %s186, 1
          %s669 = scalar_lea.sflag [#allocation4], %s668
          %s670 = sand.u32 %s186, 1
          %s671 = smul.addr %s670, 16
          %s672 = scalar_lea.vmem [#allocation8], %s671
          %674 = dma.done %s669, 256
        $region72: #{tpu_custom_call.1} parent=67 // pred_fallthru
          _
      $region68: #{tpu_custom_call.1} parent=5 // pred_fallthru
        _
    $region6: #{tpu_custom_call.1} parent=1 // loop_footer
      %s24 = sadd.s32 1, %s20
    $region7: #{tpu_custom_call.1} parent=1 // loop_footer_branch
      %19 = sbr.rel target = $region3
    $region8: #{tpu_custom_call.1} parent=1 // loop_exit
      _
    %675 = vsyncpa [#allocation3], 1
    %s676 = scalar_lea.sflag [#allocation3], 1
    %677 = vsyncpa %s676, 1
    %678 = vsyncpa [#allocation6], 1
    %679 = vsyncpa [#allocation4], 1
    %s680 = scalar_lea.sflag [#allocation4], 1
    %681 = vsyncpa %s680, 1

</llo_original>
